<compile_context>
chip_gen: v7x
topology: tpu7x:2x2x1
jax: 0.10.0
libtpu: 0.0.40
codegen_flags: <defaults>
</compile_context>

<pallas_src>
import functools

import jax
import jax.numpy as jnp
from jax import lax
from jax.experimental import pallas as pl
from jax.experimental.pallas import tpu as pltpu

_LANE = 128
_VMEM_BUDGET_BYTES = 24 * 1024 * 1024   # conservative: fits v7x's 64 MiB VMEM
_VMEM_LIMIT_BYTES = 32 * 1024 * 1024


def _heads_kernel(x_ref, w_ref, b_ref, value_ref, priors_ref, *, n_moves):
    # One fused MXU matmul: (TB, C) @ (C, P) + (1, P).
    # Fused-column layout: [0 .. n_moves-1] = policy logits, [n_moves] = value,
    # [n_moves+1 ..] = zero padding.
    logits = (
        jnp.dot(x_ref[...], w_ref[...], preferred_element_type=jnp.float32)
        + b_ref[...]
    )

    tb, p = logits.shape
    col = lax.broadcasted_iota(jnp.int32, (tb, p), 1)
    is_policy = col < n_moves

    # Numerically-stable softmax over the policy columns only.  Masked lanes
    # get -1e30, so exp(masked - m) underflows to exactly 0 (no second select).
    masked = jnp.where(is_policy, logits, jnp.float32(-1e30))
    m = jnp.max(masked, axis=1, keepdims=True)
    e = jnp.exp(masked - m)
    denom = jnp.sum(e, axis=1, keepdims=True)
    priors = e * pl.reciprocal(denom, approx=False)

    value_ref[...] = logits[:, n_moves:n_moves + 1].astype(value_ref.dtype)
    priors_ref[...] = priors[:, 0:n_moves].astype(priors_ref.dtype)


def _pick_batch_tile(batch, channels, n_moves, padded_cols, itemsize):
    """Largest TB (multiple of 8) fitting the double-buffered VMEM budget,
    capped at B/2 for B >= 16 so both v7x TensorCores get grid steps."""
    if batch <= 8:
        return batch
    fixed = 2 * (channels * padded_cols * itemsize + padded_cols * 4)
    per_row = 2 * (channels + 1 + n_moves) * itemsize
    tb_max = max(8, (_VMEM_BUDGET_BYTES - fixed) // per_row)
    tb = min(batch, tb_max)
    if batch >= 16:
        tb = min(tb, batch // 2)
    tb = max(8, (tb // 8) * 8)
    return int(tb)


def prepare_fused_params(w_value, b_value, w_policy, b_policy, dtype=jnp.float32):
    """Hoisted parameter prep (do once, not per forward call).

    Returns (w_fused (C, P), b_fused (1, P) f32, n_moves) with the layout
    [policy | value | zero-pad], P a multiple of 128 lanes."""
    C, M = w_policy.shape
    P = max(_LANE, pl.cdiv(M + 1, _LANE) * _LANE)
    w_fused = jnp.concatenate(
        [w_policy.astype(dtype),
         jnp.reshape(w_value, (C, 1)).astype(dtype),
         jnp.zeros((C, P - M - 1), dtype)],
        axis=1)
    b_fused = jnp.concatenate(
        [jnp.reshape(b_policy, (1, M)).astype(jnp.float32),
         jnp.reshape(b_value, (1, 1)).astype(jnp.float32),
         jnp.zeros((1, P - M - 1), jnp.float32)],
        axis=1)
    return w_fused, b_fused, M


def simple_heads(x, w_fused, b_fused, n_moves):
    """x: (B, C); fused params from prepare_fused_params().
    Returns (value (B, 1), priors (B, n_moves))."""
    B, C = x.shape
    P = w_fused.shape[1]
    M = n_moves
    itemsize = jnp.dtype(x.dtype).itemsize

    TB = _pick_batch_tile(B, C, M, P, itemsize)
    grid = (pl.cdiv(B, TB),)

    cost = pl.CostEstimate(
        flops=2 * B * C * P,
        transcendentals=B * P,
        bytes_accessed=(x.size + w_fused.size + B * (1 + M)) * itemsize
        + b_fused.size * 4,
    )

    value, priors = pl.pallas_call(
        functools.partial(_heads_kernel, n_moves=M),
        out_shape=(
            jax.ShapeDtypeStruct((B, 1), x.dtype),
            jax.ShapeDtypeStruct((B, M), x.dtype),
        ),
        grid_spec=pltpu.PrefetchScalarGridSpec(
            num_scalar_prefetch=0,
            grid=grid,
            in_specs=[
                pl.BlockSpec((TB, C), lambda i: (i, 0)),   # batch-tiled activations
                pl.BlockSpec((C, P), lambda i: (0, 0)),    # fused weights (small)
                pl.BlockSpec((1, P), lambda i: (0, 0)),    # fused bias row
            ],
            out_specs=[
                pl.BlockSpec((TB, 1), lambda i: (i, 0)),   # value
                pl.BlockSpec((TB, M), lambda i: (i, 0)),   # priors
            ],
        ),
        compiler_params=pltpu.CompilerParams(
            dimension_semantics=("parallel",),
            vmem_limit_bytes=_VMEM_LIMIT_BYTES,
        ),
        cost_estimate=cost,
    )(x, w_fused, b_fused)
    return value, priors


def _reference(x, w_value, b_value, w_policy, b_policy):
    value = x @ w_value + b_value
    logits = x @ w_policy + b_policy
    priors = jax.nn.softmax(logits, axis=1)
    return value, priors


if __name__ == "__main__":
    # Shapes implied by the module: x is (batch, in_channels),
    # out_moves is the policy dimension.
    batch, in_channels, out_moves = 8, 32, 16

    key = jax.random.PRNGKey(0)
    kx, kwv, kbv, kwp, kbp = jax.random.split(key, 5)

    x = jax.random.normal(kx, (batch, in_channels), dtype=jnp.float32)

    # Deterministic PyTorch-Linear-style init: U(-1/sqrt(fan_in), 1/sqrt(fan_in))
    bound = 1.0 / jnp.sqrt(jnp.float32(in_channels))
    w_value = jax.random.uniform(kwv, (in_channels, 1), jnp.float32, -bound, bound)
    b_value = jax.random.uniform(kbv, (1, 1), jnp.float32, -bound, bound)
    w_policy = jax.random.uniform(kwp, (in_channels, out_moves), jnp.float32, -bound, bound)
    b_policy = jax.random.uniform(kbp, (1, out_moves), jnp.float32, -bound, bound)

    # Parameter prep is hoisted out of the per-call path.
    w_fused, b_fused, n_moves = prepare_fused_params(
        w_value, b_value, w_policy, b_policy, dtype=x.dtype)
    jax.block_until_ready((w_fused, b_fused))

    value, priors = simple_heads(x, w_fused, b_fused, n_moves)
    jax.block_until_ready((value, priors))

    ref_value, ref_priors = _reference(x, w_value, b_value, w_policy, b_policy)
    assert value.shape == (batch, 1) and priors.shape == (batch, out_moves)
    assert jnp.allclose(value, ref_value, atol=1e-5, rtol=1e-5)
    assert jnp.allclose(priors, ref_priors, atol=1e-5, rtol=1e-5)
    assert jnp.allclose(jnp.sum(priors, axis=1), 1.0, atol=1e-5)

    print("KERNEL_OK")
</pallas_src>

<mosaic_0001>
module attributes {stable_mosaic.version = 11 : i64} {
  func.func @_heads_kernel(%arg0: i32, %arg1: memref<8x32xf32, #tpu.memory_space<vmem>>, %arg2: memref<32x128xf32, #tpu.memory_space<vmem>>, %arg3: memref<1x128xf32, #tpu.memory_space<vmem>>, %arg4: memref<8x1xf32, #tpu.memory_space<vmem>>, %arg5: memref<8x16xf32, #tpu.memory_space<vmem>>) attributes {dimension_semantics = [#tpu.dimension_semantics<parallel>], iteration_bounds = array<i64: 1>, scalar_prefetch = 0 : i64, scratch_operands = 0 : i64, tpu.core_type = #tpu.core_type<tc>, window_params = [{transform_indices = @transform_0, window_bounds = array<i64: 8, 32>}, {pipeline_mode = #tpu.pipeline_mode<synchronous>, transform_indices = @transform_1, window_bounds = array<i64: 32, 128>}, {pipeline_mode = #tpu.pipeline_mode<synchronous>, transform_indices = @transform_2, window_bounds = array<i64: 1, 128>}, {transform_indices = @transform_3, window_bounds = array<i64: 8, 1>}, {transform_indices = @transform_4, window_bounds = array<i64: 8, 16>}]} {
    %c0 = arith.constant 0 : index
    %c0_0 = arith.constant 0 : index
    %0 = vector.load %arg1[%c0, %c0_0] : memref<8x32xf32, #tpu.memory_space<vmem>>, vector<8x32xf32>
    %c0_1 = arith.constant 0 : index
    %c0_2 = arith.constant 0 : index
    %1 = vector.load %arg2[%c0_1, %c0_2] : memref<32x128xf32, #tpu.memory_space<vmem>>, vector<32x128xf32>
    %cst = arith.constant dense<0.000000e+00> : vector<8x128xf32>
    %2 = tpu.matmul %0, %1, %cst {dimension_numbers = #tpu.dot_dimension_numbers<[1], [0], [0], [1], [0, 0, 1, 1], [], []>} : vector<8x32xf32>, vector<32x128xf32>, vector<8x128xf32> -> vector<8x128xf32>
    %c0_3 = arith.constant 0 : index
    %c0_4 = arith.constant 0 : index
    %3 = vector.load %arg3[%c0_3, %c0_4] : memref<1x128xf32, #tpu.memory_space<vmem>>, vector<1x128xf32>
    %4 = vector.broadcast %3 : vector<1x128xf32> to vector<8x128xf32>
    %5 = arith.addf %2, %4 : vector<8x128xf32>
    %6 = tpu.iota {dimensions = array<i32: 1>} : vector<8x128xi32>
    %c16_i32 = arith.constant 16 : i32
    %7 = vector.broadcast %c16_i32 : i32 to vector<8x128xi32>
    %8 = arith.cmpi slt, %6, %7 : vector<8x128xi32>
    %cst_5 = arith.constant -1.000000e+30 : f32
    %9 = vector.broadcast %cst_5 : f32 to vector<8x128xf32>
    %10 = arith.select %8, %5, %9 : vector<8x128xi1>, vector<8x128xf32>
    %cst_6 = arith.constant dense<0xFF800000> : vector<8xf32>
    %11 = vector.multi_reduction <maximumf>, %10, %cst_6 [1] : vector<8x128xf32> to vector<8xf32>
    %12 = vector.shape_cast %11 : vector<8xf32> to vector<8x1xf32>
    %13 = vector.broadcast %12 : vector<8x1xf32> to vector<8x128xf32>
    %14 = arith.subf %10, %13 : vector<8x128xf32>
    %15 = math.exp %14 : vector<8x128xf32>
    %cst_7 = arith.constant dense<0.000000e+00> : vector<8xf32>
    %16 = vector.multi_reduction <add>, %15, %cst_7 [1] : vector<8x128xf32> to vector<8xf32>
    %17 = vector.shape_cast %16 : vector<8xf32> to vector<8x1xf32>
    %18 = tpu.reciprocal %17 : vector<8x1xf32> -> vector<8x1xf32>
    %19 = vector.broadcast %18 : vector<8x1xf32> to vector<8x128xf32>
    %20 = arith.mulf %15, %19 : vector<8x128xf32>
    %21 = vector.extract_strided_slice %5 {offsets = [0, 16], sizes = [8, 1], strides = [1, 1]} : vector<8x128xf32> to vector<8x1xf32>
    %c0_8 = arith.constant 0 : index
    %c0_9 = arith.constant 0 : index
    %22 = vector.load %arg4[%c0_8, %c0_9] : memref<8x1xf32, #tpu.memory_space<vmem>>, vector<8x1xf32>
    tpu.vector_store %arg4[%c0_8, %c0_9], %21 {strides = array<i32>} : memref<8x1xf32, #tpu.memory_space<vmem>>, vector<8x1xf32>,
    %23 = vector.extract_strided_slice %20 {offsets = [0, 0], sizes = [8, 16], strides = [1, 1]} : vector<8x128xf32> to vector<8x16xf32>
    %c0_10 = arith.constant 0 : index
    %c0_11 = arith.constant 0 : index
    %24 = vector.load %arg5[%c0_10, %c0_11] : memref<8x16xf32, #tpu.memory_space<vmem>>, vector<8x16xf32>
    tpu.vector_store %arg5[%c0_10, %c0_11], %23 {strides = array<i32>} : memref<8x16xf32, #tpu.memory_space<vmem>>, vector<8x16xf32>,
    return
  }
  func.func @transform_0(%arg0: i32) -> (i32, i32) {
    %c0_i32 = arith.constant 0 : i32
    %c0_i32_0 = arith.constant 0 : i32
    return %arg0, %c0_i32 : i32, i32
  }
  func.func @transform_1(%arg0: i32) -> (i32, i32) {
    %c0_i32 = arith.constant 0 : i32
    %c0_i32_0 = arith.constant 0 : i32
    %c0_i32_1 = arith.constant 0 : i32
    return %c0_i32, %c0_i32_0 : i32, i32
  }
  func.func @transform_2(%arg0: i32) -> (i32, i32) {
    %c0_i32 = arith.constant 0 : i32
    %c0_i32_0 = arith.constant 0 : i32
    %c0_i32_1 = arith.constant 0 : i32
    return %c0_i32, %c0_i32_0 : i32, i32
  }
  func.func @transform_3(%arg0: i32) -> (i32, i32) {
    %c0_i32 = arith.constant 0 : i32
    %c0_i32_0 = arith.constant 0 : i32
    return %arg0, %c0_i32 : i32, i32
  }
  func.func @transform_4(%arg0: i32) -> (i32, i32) {
    %c0_i32 = arith.constant 0 : i32
    %c0_i32_0 = arith.constant 0 : i32
    return %arg0, %c0_i32 : i32, i32
  }
}

</mosaic_0001>

<llo_original>
// kernel: tpu_custom_call.1
$region0: #{tpu_custom_call.1}
  #allocation0 [shape = 'u32[]', space=smem, size = 0x4, offset = 0x4, fixed_abs, tag = 'smem constant byte address 0x4 - core index']
  #allocation1 [shape = 'u32[144,128]{1,0:T(1,128)}', space=vmem, size = 0x12000, scoped, tag = 'internal scratch']
  %s0 = inlined_call_operand.hbm [shape: f32[8,32], index: 0, kind: input, shape index: {}]
  %s1 = inlined_call_operand.hbm [shape: f32[32,128], index: 1, kind: input, shape index: {}]
  %s2 = inlined_call_operand.vmem [shape: f32[1,128], index: 2, kind: input, shape index: {}]
  %s3 = inlined_call_operand.vmem [shape: f32[8,1], index: 3, kind: output, shape index: {0}]
  %s4 = inlined_call_operand.hbm [shape: f32[8,16], index: 4, kind: output, shape index: {1}]
  %5 = xla_tuple %s3, %s4
  %s6 = sld [smem:[#allocation0]]
  $region38: #{tpu_custom_call.1} parent=0
    _
  %s8 = ssub.s32 1, %s6
  %s9 = scalar_select 0, %s8, %s6
  $region1: #{tpu_custom_call.1} parent=0
    #allocation2 [shape = 'u8[4096]{0}', space=vmem, size = 0x1000, scoped, tag = 'input window, operand 0, single buffered']
    #allocation3 [shape = 's32[1]{0}', space=sflag, size = 0x4, scoped, tag = 'scoped memory for tpu_custom_call.1']
    #allocation4 [shape = 's32[1]{0}', space=sflag, size = 0x4, scoped, tag = 'scoped memory for tpu_custom_call.1']
    #allocation5 [shape = 'u8[16384]{0}', space=vmem, size = 0x4000, scoped, tag = 'input window, operand 1, single buffered']
    #allocation6 [shape = 's32[1]{0}', space=sflag, size = 0x4, scoped, tag = 'scoped memory for tpu_custom_call.1']
    #allocation7 [shape = 'u8[4096]{0}', space=vmem, size = 0x1000, scoped, tag = 'output window, operand 1, single buffered']
    %10 = vsyncpa [#allocation3], 0
    %11 = vsyncpa [#allocation6], 0
    %12 = vsyncpa [#allocation4], 0
    // Predicated region
    $region2: #{tpu_custom_call.1} parent=1 // pred_check
      _
    $region3: #{tpu_custom_call.1} parent=1 // pred_check_branch
      %14 = sbr.rel (0) target = $region5
    $region4: #{tpu_custom_call.1} parent=1 // pred_region
      %s16 = ssub.s32 128, 128
      %17 = vsyncadd [#allocation3], %s16
      %s19 = sshll.u32 [#allocation2], 4
      %s20 = int_to_ptr.vmem [resolvable:$true] %s19
      %22 = dma.hbm_to_vmem [thread:$0]  %s0, 128, %s20, [#allocation3]
    $region5: #{tpu_custom_call.1} parent=1 // pred_fallthru
      _
    // Predicated region
    $region6: #{tpu_custom_call.1} parent=1 // pred_check
      _
    $region7: #{tpu_custom_call.1} parent=1 // pred_check_branch
      %24 = sbr.rel (0) target = $region9
    $region8: #{tpu_custom_call.1} parent=1 // pred_region
      %s26 = ssub.s32 512, 512
      %27 = vsyncadd [#allocation6], %s26
      %s28 = sshll.u32 [#allocation5], 4
      %s29 = int_to_ptr.vmem [resolvable:$true] %s28
      %34 = dma.hbm_to_vmem [thread:$0]  %s1, 512, %s29, [#allocation6], 128, 128, 8
    $region9: #{tpu_custom_call.1} parent=1 // pred_fallthru
      _
    // Predicated region
    $region10: #{tpu_custom_call.1} parent=1 // pred_check
      _
    $region11: #{tpu_custom_call.1} parent=1 // pred_check_branch
      %36 = sbr.rel (0) target = $region13
    $region12: #{tpu_custom_call.1} parent=1 // pred_region
      _
    $region13: #{tpu_custom_call.1} parent=1 // pred_fallthru
      _
    // Predicated region
    $region14: #{tpu_custom_call.1} parent=1 // pred_check
      _
    $region15: #{tpu_custom_call.1} parent=1 // pred_check_branch
      %38 = sbr.rel (0) target = $region17
    $region16: #{tpu_custom_call.1} parent=1 // pred_region
      %39 = dma.done [#allocation3], 128
    $region17: #{tpu_custom_call.1} parent=1 // pred_fallthru
      _
    // Predicated region
    $region18: #{tpu_custom_call.1} parent=1 // pred_check
      _
    $region19: #{tpu_custom_call.1} parent=1 // pred_check_branch
      %41 = sbr.rel (0) target = $region21
    $region20: #{tpu_custom_call.1} parent=1 // pred_region
      %42 = dma.done [#allocation6], 512
    $region21: #{tpu_custom_call.1} parent=1 // pred_fallthru
      _
    %v43 = vld [vmem:[#allocation2] sm:$0xff]
    %v44 = vld [vmem:[#allocation5] sm:$0xff]
    %v45 = vld [vmem:[#allocation5 + $0x8] sm:$0xff]
    %v46 = vld [vmem:[#allocation5 + $0x10] sm:$0xff]
    %v47 = vld [vmem:[#allocation5 + $0x18] sm:$0xff]
    %v48 = vld [vmem:[%s2] sm:$0x1]
    %v50 = vlaneseq
    %v51 = vshrl.u32 %v50, 7
    %v52 = vsub.s32 0, %v51
    %v53 = vrot.slane %v48, %v52
    %vm55 = vcmask 261120
    %v57 = vsel %vm55, %v43, 0
    %59 = vmatprep.subr.mxu0 0.0
    %60 = vmatpush1.msra.mxu0 %v44
    %61 = vmatprep.subr.mxu0 0.0
    %62 = vmatpush1.msra.mxu0 %v45
    %63 = vmatprep.subr.mxu0 0.0
    %64 = vmatpush1.msra.mxu0 %v46
    %65 = vmatprep.subr.mxu0 0.0
    %66 = vmatpush1.msra.mxu0 %v47
    %67 = vmatprep.subr.mxu0 0.0
    %68 = vmatpush1.msra.mxu0 0.0
    %69 = vmatprep.subr.mxu0 0.0
    %70 = vmatpush1.msra.mxu0 0.0
    %71 = vmatprep.subr.mxu0 0.0
    %72 = vmatpush1.msra.mxu0 0.0
    %73 = vmatprep.subr.mxu0 0.0
    %74 = vmatpush1.msra.mxu0 0.0
    %75 = vmatprep.subr.mxu0 0.0
    %76 = vmatpush1.msra.mxu0 0.0
    %77 = vmatprep.subr.mxu0 0.0
    %78 = vmatpush1.msra.mxu0 0.0
    %79 = vmatprep.subr.mxu0 0.0
    %80 = vmatpush1.msra.mxu0 0.0
    %81 = vmatprep.subr.mxu0 0.0
    %82 = vmatpush1.msra.mxu0 0.0
    %83 = vmatprep.subr.mxu0 0.0
    %84 = vmatpush1.msra.mxu0 0.0
    %85 = vmatprep.subr.mxu0 0.0
    %86 = vmatpush1.msra.mxu0 0.0
    %87 = vmatprep.subr.mxu0 0.0
    %88 = vmatpush1.msra.mxu0 0.0
    %89 = vmatprep.subr.mxu0 0.0
    %90 = vmatpush1.msra.mxu0 0.0
    %91 = vmatprep.subr.mxu0 0.0
    %92 = vmatpush1.msra.mxu0 0.0
    %93 = vmatprep.subr.mxu0 0.0
    %94 = vmatpush1.msra.mxu0 0.0
    %95 = vmatprep.subr.mxu0 0.0
    %96 = vmatpush1.msra.mxu0 0.0
    %97 = vmatprep.subr.mxu0 0.0
    %98 = vmatpush1.msra.mxu0 0.0
    %99 = vmatprep.subr.mxu0 0.0
    %100 = vmatpush1.msra.mxu0 0.0
    %101 = vmatprep.subr.mxu0 0.0
    %102 = vmatpush1.msra.mxu0 0.0
    %103 = vmatprep.subr.mxu0 0.0
    %104 = vmatpush1.msra.mxu0 0.0
    %105 = vmatprep.subr.mxu0 0.0
    %106 = vmatpush1.msra.mxu0 0.0
    %107 = vmatprep.subr.mxu0 0.0
    %108 = vmatpush1.msra.mxu0 0.0
    %109 = vmatprep.subr.mxu0 0.0
    %110 = vmatpush1.msra.mxu0 0.0
    %111 = vmatprep.subr.mxu0 0.0
    %112 = vmatpush1.msra.mxu0 0.0
    %113 = vmatprep.subr.mxu0 0.0
    %114 = vmatpush1.msra.mxu0 0.0
    %115 = vmatprep.subr.mxu0 0.0
    %116 = vmatpush1.msra.mxu0 0.0
    %117 = vmatprep.subr.mxu0 0.0
    %118 = vmatpush1.msra.mxu0 0.0
    %119 = vmatprep.subr.mxu0 0.0
    %120 = vmatpush1.msra.mxu0 0.0
    %121 = vmatprep.subr.mxu0 0.0
    %122 = vmatpush1.msra.mxu0 0.0
    %123 = vmatprep.mubr.f32.mxu0 0.0
    %124 = vmatmul.mubr.f32.gmra.mrb[0].mxu0 %v57
    %v125 = vpop.f32.mrb[0].mxu0
    %v126 = vadd.f32 %v53, %v125
    %v127 = vpop.f32.mrb[0].mxu0
    %128 = vdwg.mxu0
    %v129 = vlaneseq
    %v130 = vand.u32 %v129, 127
    %vm131 = vcmp.lt.s32.totalorder %v130, 16
    %v132 = vsel %vm131, %v126, -1e+30
    %133 = vmax.xlane.f32.xlu0 %v132
    %v134 = vpop.xlane.xlu0 %133
    %v135 = vsub.f32 %v132, %v134
    %v136 = vmul.f32 %v135, 1.442695
    %v137 = vpow.pop %v136
    %138 = vadd.xlane.f32.xlu0 %v137
    %v139 = vpop.xlane.xlu0 %138
    %v140 = vrcp.pop %v139
    %v141 = vmul.f32 %v137, %v140
    %143 = vrot.lane.b32.xlu0 %v126, 112
    %v144 = vpop.permute.xlu0 %143
    %vm146 = vcmask 7168
    %147 = vst.msk [vmem:[%s3] sm:$0xff] %vm146, %v144
    %vm148 = vcmask 130048
    %149 = vst.msk [vmem:[#allocation7] sm:$0xff] %vm148, %v141
    // Predicated region
    $region22: #{tpu_custom_call.1} parent=1 // pred_check
      _
    $region23: #{tpu_custom_call.1} parent=1 // pred_check_branch
      %151 = sbr.rel (0) target = $region25
    $region24: #{tpu_custom_call.1} parent=1 // pred_region
      _
    $region25: #{tpu_custom_call.1} parent=1 // pred_fallthru
      _
    // Predicated region
    $region26: #{tpu_custom_call.1} parent=1 // pred_check
      _
    $region27: #{tpu_custom_call.1} parent=1 // pred_check_branch
      %153 = sbr.rel (0) target = $region29
    $region28: #{tpu_custom_call.1} parent=1 // pred_region
      %s155 = ssub.s32 128, 128
      %156 = vsyncadd [#allocation4], %s155
      %s158 = sshll.u32 [#allocation7], 4
      %s159 = int_to_ptr.vmem [resolvable:$true] %s158
      %161 = dma.vmem_to_hbm [thread:$0]  %s159, 128, %s4, [#allocation4]
    $region29: #{tpu_custom_call.1} parent=1 // pred_fallthru
      _
    // Predicated region
    $region30: #{tpu_custom_call.1} parent=1 // pred_check
      _
    $region31: #{tpu_custom_call.1} parent=1 // pred_check_branch
      %163 = sbr.rel (0) target = $region33
    $region32: #{tpu_custom_call.1} parent=1 // pred_region
      _
    $region33: #{tpu_custom_call.1} parent=1 // pred_fallthru
      _
    // Predicated region
    $region34: #{tpu_custom_call.1} parent=1 // pred_check
      _
    $region35: #{tpu_custom_call.1} parent=1 // pred_check_branch
      %165 = sbr.rel (0) target = $region37
    $region36: #{tpu_custom_call.1} parent=1 // pred_region
      %166 = dma.done [#allocation4], 128
    $region37: #{tpu_custom_call.1} parent=1 // pred_fallthru
      _
    %167 = vsyncpa [#allocation3], 1
    %168 = vsyncpa [#allocation6], 1
    %169 = vsyncpa [#allocation4], 1

</llo_original>
